<compile_context>
chip_gen: v7x
topology: tpu7x:2x2x1
jax: 0.10.0
libtpu: 0.0.40
codegen_flags: <defaults>
</compile_context>

<pallas_src>
import functools

import jax
import jax.numpy as jnp
from jax import lax
from jax.experimental import pallas as pl
from jax.experimental.pallas import tpu as pltpu


def gcn_kernel(scal_ref, x_ref, astat_ref, dadj_ref, mw_ref, mb_ref, o_ref,
               amix_scr, hcat_scr, *, gdep, bt, batch, c_in):
    w_self = scal_ref[0]            # softmax(weight)[0]   : self term
    w_dyn = scal_ref[1]             # softmax(weight)[-1]  : dynamic-graph term
    adt = amix_scr.dtype            # adjacency compute dtype (bf16 or f32)

    # Valid (non-padded) samples in this batch tile. Static trip count when bt | batch.
    if batch % bt == 0:
        n_valid = bt
    else:
        n_valid = jnp.minimum(bt, batch - pl.program_id(0) * bt)

    def body(b, carry):
        x_t = x_ref[b]                                      # (c_in, N) f32, nodes on lanes
        # Fold static + dynamic graphs once per sample (f32 mix, single downcast),
        # reused across all gdep propagation steps.
        amix_scr[...] = (astat_ref[...].astype(jnp.float32)
                         + w_dyn * dadj_ref[b].astype(jnp.float32)).astype(adt)
        x_self = w_self * x_t                               # depth-loop invariant

        h = x_t                                             # h_0^T
        hcat_scr[0:c_in, :] = h
        for j in range(gdep):                               # gdep is tiny & static
            # h_{j+1}^T = w0*x^T + h_j^T · A_mix^T
            # (contract A_mix on its 2nd axis: no transpose materialized)
            prop = lax.dot_general(h.astype(adt), amix_scr[...],
                                   dimension_numbers=(((1,), (1,)), ((), ())),
                                   preferred_element_type=jnp.float32)
            h = x_self + prop
            hcat_scr[(j + 1) * c_in:(j + 2) * c_in, :] = h

        # relu(Linear(concat(out, -1))) as ONE (c_out, K) @ (K, N) matmul.
        acc = jnp.dot(mw_ref[...], hcat_scr[...],
                      preferred_element_type=jnp.float32)   # (c_out, N)
        o_ref[b] = jnp.maximum(acc + mb_ref[...], 0.0).astype(o_ref.dtype)
        return carry

    lax.fori_loop(0, n_valid, body, 0)


def gcn_forward(x, norm_adj, dyn_norm_adj, weight, mlp_w, mlp_b, *,
                gdep, batch_tile=None, adj_dtype=jnp.bfloat16):
    """Pallas GCN forward (type='RNN').

    x:            (B, N, c_in) float32
    norm_adj:     (G, N, N)    float32, stacked static adjacencies
    dyn_norm_adj: (B, N, N)    float32
    weight:       (G + 2,)     float32  (mixing weights, softmaxed in the wrapper)
    mlp_w:        (c_out, (gdep+1)*c_in), mlp_b: (c_out,)
    returns       (B, N, c_out)
    """
    B, N, c_in = x.shape
    G = norm_adj.shape[0]
    c_out = mlp_w.shape[0]
    K = (gdep + 1) * c_in
    assert mlp_w.shape == (c_out, K)
    adj_bytes = jnp.dtype(adj_dtype).itemsize

    # Mixing-weight softmax + static-adjacency pre-mix done ONCE here (not per sample).
    sm = jax.nn.softmax(weight.astype(jnp.float32))                        # (G+2,)
    a_static = jnp.einsum('g,ghw->hw', sm[1:G + 1],
                          norm_adj.astype(jnp.float32)).astype(adj_dtype)  # (N, N)
    scal = jnp.stack([sm[0], sm[G + 1]]).astype(jnp.float32)               # (2,) -> SMEM

    # Lane-dense layouts: features on sublanes, nodes on lanes.
    x_t = jnp.swapaxes(x, 1, 2).astype(jnp.float32)                        # (B, c_in, N)
    dadj = dyn_norm_adj.astype(adj_dtype)                                  # (B, N, N)
    mw = jnp.asarray(mlp_w, jnp.float32)                                   # (c_out, K)
    mb = jnp.asarray(mlp_b, jnp.float32).reshape(c_out, 1)                 # (c_out, 1)

    # ---- generation-aware VMEM budgeting -------------------------------------------
    try:
        vmem_cap = pltpu.get_tpu_info().vmem_capacity_bytes   # 128 MiB v5e/v6e, 64 MiB/core v7x
    except Exception:
        vmem_cap = 64 * 1024 * 1024                           # conservative fallback
    vmem_limit = int(vmem_cap * 0.80)                         # ~102 MiB v5e/v6e, ~51 MiB v7x
    budget = vmem_limit - (2 << 20)                           # headroom for compiler scratch

    fixed = (2 * N * N * adj_bytes                            # pre-mixed static adj (x2 buf)
             + N * N * adj_bytes                              # a_mix scratch
             + K * N * 4                                      # h-concat scratch
             + 2 * (c_out * K + c_out) * 4)                   # mlp weight / bias
    per_sample = 2 * (N * N * adj_bytes + c_in * N * 4 + c_out * N * 4)   # double-buffered

    bt_cap = max(1, min(B, (budget - fixed) // per_sample))
    if B >= 2:
        bt_cap = min(bt_cap, -(-B // 2))       # >=2 grid steps: keep both v7x TCs busy
    if batch_tile is not None:
        bt_cap = max(1, min(bt_cap, batch_tile))
    bt = bt_cap
    for cand in range(bt_cap, max(1, bt_cap // 2) - 1, -1):   # snap to a divisor of B
        if B % cand == 0:
            bt = cand
            break

    n_tiles = pl.cdiv(B, bt)
    Bp = n_tiles * bt
    if Bp != B:
        x_t = jnp.pad(x_t, ((0, Bp - B), (0, 0), (0, 0)))
        dadj = jnp.pad(dadj, ((0, Bp - B), (0, 0), (0, 0)))

    kernel = functools.partial(gcn_kernel, gdep=gdep, bt=bt, batch=B, c_in=c_in)

    cost = pl.CostEstimate(
        flops=int(B * gdep * 2 * N * N * c_in + B * 2 * N * K * c_out),
        transcendentals=0,
        bytes_accessed=int(B * N * N * adj_bytes + N * N * adj_bytes
                           + B * N * (c_in + c_out) * 4),
    )

    out_t = pl.pallas_call(
        kernel,
        out_shape=jax.ShapeDtypeStruct((Bp, c_out, N), x.dtype),
        grid_spec=pltpu.PrefetchScalarGridSpec(
            num_scalar_prefetch=0,
            grid=(n_tiles,),
            in_specs=[
                pl.BlockSpec(memory_space=pltpu.MemorySpace.SMEM),         # mixing scalars
                pl.BlockSpec((bt, c_in, N), lambda b: (b, 0, 0)),          # x^T tile
                pl.BlockSpec((N, N), lambda b: (0, 0)),                    # pre-mixed static adj
                pl.BlockSpec((bt, N, N), lambda b: (b, 0, 0)),             # dyn adj tile
                pl.BlockSpec((c_out, K), lambda b: (0, 0)),                # mlp weight
                pl.BlockSpec((c_out, 1), lambda b: (0, 0)),                # mlp bias
            ],
            out_specs=pl.BlockSpec((bt, c_out, N), lambda b: (b, 0, 0)),   # out^T tile
            scratch_shapes=[
                pltpu.VMEM((N, N), adj_dtype),                             # folded A_mix
                pltpu.VMEM((K, N), jnp.float32),                           # h-concat
            ],
        ),
        compiler_params=pltpu.CompilerParams(
            dimension_semantics=("parallel",),
            vmem_limit_bytes=vmem_limit,
        ),
        cost_estimate=cost,
    )(scal, x_t, a_static, dadj, mw, mb)

    return jnp.swapaxes(out_t[:B], 1, 2)                                   # (B, N, c_out)


def gcn_reference(x, norm_adj, dyn_norm_adj, weight, mlp_w, mlp_b, gdep):
    """Pure-JAX reference matching the PyTorch forward (type='RNN')."""
    w = jax.nn.softmax(weight)
    h = x
    outs = [h]
    for _ in range(gdep):
        h_next = w[0] * x
        for i in range(norm_adj.shape[0]):
            h_next = h_next + w[i + 1] * jnp.einsum('hw,bwc->bhc', norm_adj[i], h)
        h_next = h_next + w[-1] * jnp.einsum('bhw,bwc->bhc', dyn_norm_adj, h)
        h = h_next
        outs.append(h)
    ho = jnp.concatenate(outs, axis=-1)
    return jax.nn.relu(ho @ mlp_w.T + mlp_b)


if __name__ == "__main__":
    # small, deterministic configuration
    B, N, c_in, c_out = 2, 16, 4, 8
    gdep, graph_num = 2, 2
    K = (gdep + 1) * c_in

    key = jax.random.PRNGKey(0)
    k1, k2, k3, k4, k5 = jax.random.split(key, 5)

    x = jax.random.normal(k1, (B, N, c_in), dtype=jnp.float32)

    # row-normalized random adjacencies (static: graph_num stacked; dynamic: per-batch)
    sa = jax.random.uniform(k2, (graph_num, N, N), dtype=jnp.float32)
    norm_adj = sa / jnp.sum(sa, axis=-1, keepdims=True)
    da = jax.random.uniform(k3, (B, N, N), dtype=jnp.float32)
    dyn_norm_adj = da / jnp.sum(da, axis=-1, keepdims=True)

    # parameters: mixing weights filled with 1.0 (as in the module); Linear init
    # uniform in +/- 1/sqrt(fan_in) (PyTorch-style bound).
    weight = jnp.ones((graph_num + 1 + 1,), dtype=jnp.float32)
    bound = 1.0 / jnp.sqrt(jnp.float32(K))
    mlp_w = jax.random.uniform(k4, (c_out, K), minval=-bound, maxval=bound,
                               dtype=jnp.float32)
    mlp_b = jax.random.uniform(k5, (c_out,), minval=-bound, maxval=bound,
                               dtype=jnp.float32)

    ref = gcn_reference(x, norm_adj, dyn_norm_adj, weight, mlp_w, mlp_b, gdep)

    # f32 adjacency path: bit-accurate check against the reference.
    out_f32 = gcn_forward(x, norm_adj, dyn_norm_adj, weight, mlp_w, mlp_b,
                          gdep=gdep, adj_dtype=jnp.float32)
    out_f32 = jax.block_until_ready(out_f32)
    assert out_f32.shape == (B, N, c_out)
    assert jnp.allclose(out_f32, ref, atol=1e-5, rtol=1e-5), "f32 mismatch vs reference"

    # bf16-adjacency production path (halved HBM traffic): looser tolerance.
    out_bf16 = gcn_forward(x, norm_adj, dyn_norm_adj, weight, mlp_w, mlp_b,
                           gdep=gdep, adj_dtype=jnp.bfloat16)
    out_bf16 = jax.block_until_ready(out_bf16)
    assert out_bf16.shape == (B, N, c_out)
    assert jnp.allclose(out_bf16, ref, atol=3e-2, rtol=3e-2), "bf16 mismatch vs reference"

    # TODO(synk): type='common' branch and nn.Dropout are defined in __init__ but the
    # 'RNN' forward path (implemented here) never applies dropout; 'common' not implemented.
    print("KERNEL_OK")
</pallas_src>

<mosaic_0001>
module attributes {stable_mosaic.version = 11 : i64} {
  func.func @gcn_kernel(%arg0: i32, %arg1: memref<2xf32, #tpu.memory_space<smem>>, %arg2: memref<1x4x16xf32, #tpu.memory_space<vmem>>, %arg3: memref<16x16xf32, #tpu.memory_space<vmem>>, %arg4: memref<1x16x16xf32, #tpu.memory_space<vmem>>, %arg5: memref<8x12xf32, #tpu.memory_space<vmem>>, %arg6: memref<8x1xf32, #tpu.memory_space<vmem>>, %arg7: memref<1x8x16xf32, #tpu.memory_space<vmem>>, %arg8: memref<16x16xf32, #tpu.memory_space<vmem>>, %arg9: memref<12x16xf32, #tpu.memory_space<vmem>>) attributes {dimension_semantics = [#tpu.dimension_semantics<parallel>], iteration_bounds = array<i64: 2>, scalar_prefetch = 0 : i64, scratch_operands = 2 : i64, tpu.core_type = #tpu.core_type<tc>, window_params = [{transform_indices = @transform_0, window_bounds = array<i64: 2>}, {transform_indices = @transform_1, window_bounds = array<i64: 1, 4, 16>}, {pipeline_mode = #tpu.pipeline_mode<synchronous>, transform_indices = @transform_2, window_bounds = array<i64: 16, 16>}, {transform_indices = @transform_3, window_bounds = array<i64: 1, 16, 16>}, {pipeline_mode = #tpu.pipeline_mode<synchronous>, transform_indices = @transform_4, window_bounds = array<i64: 8, 12>}, {pipeline_mode = #tpu.pipeline_mode<synchronous>, transform_indices = @transform_5, window_bounds = array<i64: 8, 1>}, {transform_indices = @transform_6, window_bounds = array<i64: 1, 8, 16>}]} {
    %c0 = arith.constant 0 : index
    %0 = memref.load %arg1[%c0] : memref<2xf32, #tpu.memory_space<smem>>
    %c1 = arith.constant 1 : index
    %1 = memref.load %arg1[%c1] : memref<2xf32, #tpu.memory_space<smem>>
    %c0_i32 = arith.constant 0 : i32
    %2 = arith.index_cast %c0_i32 : i32 to index
    %c0_0 = arith.constant 0 : index
    %c0_1 = arith.constant 0 : index
    %3 = vector.load %arg2[%2, %c0_0, %c0_1] : memref<1x4x16xf32, #tpu.memory_space<vmem>>, vector<1x4x16xf32>
    %4 = vector.shape_cast %3 : vector<1x4x16xf32> to vector<4x16xf32>
    %c0_2 = arith.constant 0 : index
    %c0_3 = arith.constant 0 : index
    %5 = vector.load %arg3[%c0_2, %c0_3] : memref<16x16xf32, #tpu.memory_space<vmem>>, vector<16x16xf32>
    %6 = arith.index_cast %c0_i32 : i32 to index
    %c0_4 = arith.constant 0 : index
    %c0_5 = arith.constant 0 : index
    %7 = vector.load %arg4[%6, %c0_4, %c0_5] : memref<1x16x16xf32, #tpu.memory_space<vmem>>, vector<1x16x16xf32>
    %8 = vector.shape_cast %7 : vector<1x16x16xf32> to vector<16x16xf32>
    %9 = vector.broadcast %1 : f32 to vector<16x16xf32>
    %10 = arith.mulf %9, %8 : vector<16x16xf32>
    %11 = arith.addf %5, %10 : vector<16x16xf32>
    %c0_6 = arith.constant 0 : index
    %c0_7 = arith.constant 0 : index
    %12 = vector.load %arg8[%c0_6, %c0_7] : memref<16x16xf32, #tpu.memory_space<vmem>>, vector<16x16xf32>
    tpu.vector_store %arg8[%c0_6, %c0_7], %11 {strides = array<i32>} : memref<16x16xf32, #tpu.memory_space<vmem>>, vector<16x16xf32>,
    %13 = vector.broadcast %0 : f32 to vector<4x16xf32>
    %14 = arith.mulf %13, %4 : vector<4x16xf32>
    %c0_8 = arith.constant 0 : index
    %c0_9 = arith.constant 0 : index
    %15 = vector.load %arg9[%c0_8, %c0_9] : memref<12x16xf32, #tpu.memory_space<vmem>>, vector<4x16xf32>
    tpu.vector_store %arg9[%c0_8, %c0_9], %4 {strides = array<i32>} : memref<12x16xf32, #tpu.memory_space<vmem>>, vector<4x16xf32>,
    %c0_10 = arith.constant 0 : index
    %c0_11 = arith.constant 0 : index
    %16 = vector.load %arg8[%c0_10, %c0_11] : memref<16x16xf32, #tpu.memory_space<vmem>>, vector<16x16xf32>
    %cst = arith.constant dense<0.000000e+00> : vector<4x16xf32>
    %17 = tpu.matmul %4, %16, %cst {dimension_numbers = #tpu.dot_dimension_numbers<[1], [1], [0], [0], [0, 0, 1, 0], [], []>} : vector<4x16xf32>, vector<16x16xf32>, vector<4x16xf32> -> vector<4x16xf32>
    %18 = arith.addf %14, %17 : vector<4x16xf32>
    %c4 = arith.constant 4 : index
    %c0_12 = arith.constant 0 : index
    %19 = vector.load %arg9[%c4, %c0_12] : memref<12x16xf32, #tpu.memory_space<vmem>>, vector<4x16xf32>
    tpu.vector_store %arg9[%c4, %c0_12], %18 {strides = array<i32>} : memref<12x16xf32, #tpu.memory_space<vmem>>, vector<4x16xf32>,
    %c0_13 = arith.constant 0 : index
    %c0_14 = arith.constant 0 : index
    %20 = vector.load %arg8[%c0_13, %c0_14] : memref<16x16xf32, #tpu.memory_space<vmem>>, vector<16x16xf32>
    %cst_15 = arith.constant dense<0.000000e+00> : vector<4x16xf32>
    %21 = tpu.matmul %18, %20, %cst_15 {dimension_numbers = #tpu.dot_dimension_numbers<[1], [1], [0], [0], [0, 0, 1, 0], [], []>} : vector<4x16xf32>, vector<16x16xf32>, vector<4x16xf32> -> vector<4x16xf32>
    %22 = arith.addf %14, %21 : vector<4x16xf32>
    %c8 = arith.constant 8 : index
    %c0_16 = arith.constant 0 : index
    %23 = vector.load %arg9[%c8, %c0_16] : memref<12x16xf32, #tpu.memory_space<vmem>>, vector<4x16xf32>
    tpu.vector_store %arg9[%c8, %c0_16], %22 {strides = array<i32>} : memref<12x16xf32, #tpu.memory_space<vmem>>, vector<4x16xf32>,
    %c0_17 = arith.constant 0 : index
    %c0_18 = arith.constant 0 : index
    %24 = vector.load %arg5[%c0_17, %c0_18] : memref<8x12xf32, #tpu.memory_space<vmem>>, vector<8x12xf32>
    %c0_19 = arith.constant 0 : index
    %c0_20 = arith.constant 0 : index
    %25 = vector.load %arg9[%c0_19, %c0_20] : memref<12x16xf32, #tpu.memory_space<vmem>>, vector<12x16xf32>
    %cst_21 = arith.constant dense<0.000000e+00> : vector<8x16xf32>
    %26 = tpu.matmul %24, %25, %cst_21 {dimension_numbers = #tpu.dot_dimension_numbers<[1], [0], [0], [1], [0, 0, 1, 1], [], []>} : vector<8x12xf32>, vector<12x16xf32>, vector<8x16xf32> -> vector<8x16xf32>
    %c0_22 = arith.constant 0 : index
    %c0_23 = arith.constant 0 : index
    %27 = vector.load %arg6[%c0_22, %c0_23] : memref<8x1xf32, #tpu.memory_space<vmem>>, vector<8x1xf32>
    %28 = vector.broadcast %27 : vector<8x1xf32> to vector<8x16xf32>
    %29 = arith.addf %26, %28 : vector<8x16xf32>
    %cst_24 = arith.constant 0.000000e+00 : f32
    %30 = vector.broadcast %cst_24 : f32 to vector<8x16xf32>
    %31 = arith.maximumf %29, %30 : vector<8x16xf32>
    %32 = arith.index_cast %c0_i32 : i32 to index
    %c0_25 = arith.constant 0 : index
    %c0_26 = arith.constant 0 : index
    %33 = vector.load %arg7[%32, %c0_25, %c0_26] : memref<1x8x16xf32, #tpu.memory_space<vmem>>, vector<1x8x16xf32>
    %34 = vector.shape_cast %33 : vector<1x8x16xf32> to vector<8x16xf32>
    %35 = vector.shape_cast %31 : vector<8x16xf32> to vector<1x8x16xf32>
    tpu.vector_store %arg7[%32, %c0_25, %c0_26], %35 {strides = array<i32>} : memref<1x8x16xf32, #tpu.memory_space<vmem>>, vector<1x8x16xf32>,
    %c1_i32 = arith.constant 1 : i32
    return
  }
  func.func @transform_0(%arg0: i32) -> i32 {
    %c0_i32 = arith.constant 0 : i32
    %c0_i32_0 = arith.constant 0 : i32
    return %c0_i32 : i32
  }
  func.func @transform_1(%arg0: i32) -> (i32, i32, i32) {
    %c0_i32 = arith.constant 0 : i32
    %c0_i32_0 = arith.constant 0 : i32
    %c0_i32_1 = arith.constant 0 : i32
    return %arg0, %c0_i32, %c0_i32_0 : i32, i32, i32
  }
  func.func @transform_2(%arg0: i32) -> (i32, i32) {
    %c0_i32 = arith.constant 0 : i32
    %c0_i32_0 = arith.constant 0 : i32
    %c0_i32_1 = arith.constant 0 : i32
    return %c0_i32, %c0_i32_0 : i32, i32
  }
  func.func @transform_3(%arg0: i32) -> (i32, i32, i32) {
    %c0_i32 = arith.constant 0 : i32
    %c0_i32_0 = arith.constant 0 : i32
    %c0_i32_1 = arith.constant 0 : i32
    return %arg0, %c0_i32, %c0_i32_0 : i32, i32, i32
  }
  func.func @transform_4(%arg0: i32) -> (i32, i32) {
    %c0_i32 = arith.constant 0 : i32
    %c0_i32_0 = arith.constant 0 : i32
    %c0_i32_1 = arith.constant 0 : i32
    return %c0_i32, %c0_i32_0 : i32, i32
  }
  func.func @transform_5(%arg0: i32) -> (i32, i32) {
    %c0_i32 = arith.constant 0 : i32
    %c0_i32_0 = arith.constant 0 : i32
    %c0_i32_1 = arith.constant 0 : i32
    return %c0_i32, %c0_i32_0 : i32, i32
  }
  func.func @transform_6(%arg0: i32) -> (i32, i32, i32) {
    %c0_i32 = arith.constant 0 : i32
    %c0_i32_0 = arith.constant 0 : i32
    %c0_i32_1 = arith.constant 0 : i32
    return %arg0, %c0_i32, %c0_i32_0 : i32, i32, i32
  }
}

</mosaic_0001>

<llo_original>
// kernel: tpu_custom_call.1
$region0: #{tpu_custom_call.1}
  #allocation0 [shape = 'u32[]', space=smem, size = 0x4, offset = 0x4, fixed_abs, tag = 'smem constant byte address 0x4 - core index']
  #allocation1 [shape = 'u32[144,128]{1,0:T(1,128)}', space=vmem, size = 0x12000, scoped, tag = 'internal scratch']
  #allocation2 [shape = 'f32[16,16]{1,0:T(8,128)}', space=vmem, size = 0x2000, scoped, tag = 'scratch operand']
  #allocation3 [shape = 'f32[12,16]{1,0:T(8,128)}', space=vmem, size = 0x2000, scoped, tag = 'scratch operand']
  %s0 = inlined_call_operand.hbm [shape: f32[2], index: 0, kind: input, shape index: {}]
  %s1 = inlined_call_operand.hbm [shape: f32[2,4,16], index: 1, kind: input, shape index: {}]
  %s2 = inlined_call_operand.vmem [shape: f32[16,16], index: 2, kind: input, shape index: {}]
  %s3 = inlined_call_operand.hbm [shape: f32[2,16,16], index: 3, kind: input, shape index: {}]
  %s4 = inlined_call_operand.vmem [shape: f32[8,12], index: 4, kind: input, shape index: {}]
  %s5 = inlined_call_operand.vmem [shape: f32[8,1], index: 5, kind: input, shape index: {}]
  %s6 = inlined_call_operand.hbm [shape: f32[2,8,16], index: 6, kind: output, shape index: {}]
  %s7 = sld [smem:[#allocation0]]
  $region69: #{tpu_custom_call.1} parent=0
    _
  %s9 = ssub.s32 1, %s7
  %s10 = scalar_select 0, %s9, %s7
  $region1: #{tpu_custom_call.1} parent=0
    #allocation4 [shape = 'u8[512]{0}', space=smem, size = 0x200, scoped, tag = 'input window, operand 0, single buffered']
    #allocation5 [shape = 's32[2]{0}', space=sflag, size = 0x8, scoped, tag = 'scoped memory for tpu_custom_call.1']
    #allocation6 [shape = 's32[2]{0}', space=sflag, size = 0x8, scoped, tag = 'scoped memory for tpu_custom_call.1']
    #allocation7 [shape = 's32[2]{0}', space=sflag, size = 0x8, scoped, tag = 'scoped memory for tpu_custom_call.1']
    #allocation8 [shape = 'u8[4096]{0}', space=vmem, size = 0x1000, scoped, tag = 'input window, operand 1']
    #allocation9 [shape = 'u8[16384]{0}', space=vmem, size = 0x4000, scoped, tag = 'input window, operand 3']
    #allocation10 [shape = 's32[2]{0}', space=sflag, size = 0x8, scoped, tag = 'scoped memory for tpu_custom_call.1']
    #allocation11 [shape = 'u8[8192]{0}', space=vmem, size = 0x2000, scoped, tag = 'output window, operand 0']
    %11 = vsyncpa [#allocation7], 0
    %12 = vsyncpa [#allocation5], 0
    %s13 = scalar_lea.sflag [#allocation5], 1
    %14 = vsyncpa %s13, 0
    %15 = vsyncpa [#allocation10], 0
    %s16 = scalar_lea.sflag [#allocation10], 1
    %17 = vsyncpa %s16, 0
    %18 = vsyncpa [#allocation6], 0
    %s19 = scalar_lea.sflag [#allocation6], 1
    %20 = vsyncpa %s19, 0
    loop: start=0, step=1, limit=4
    $region2: #{tpu_custom_call.1} parent=1 // loop_pre_header
      _
    $region3: #{tpu_custom_call.1} parent=1 // loop_header
      %s22 = sphi 0, %s26
      %p23 = scmp.ge.s32.totalorder %s22, 4
      %s30 = sphi 0, %s30
      %s32 = sphi 0, %s30
      %s33 = sphi 0, %s32
      %s47 = sphi 0, %s33
      %s53 = sphi 0, %s55
      %s56 = sphi 0, %s53
      %s57 = sphi 0, %s56
      %s73 = sphi 0, %s57
      %s77 = sphi 0, %s77
      %s79 = sphi 0, %s77
      %s80 = sphi 0, %s79
      %s94 = sphi 0, %s80
      %s100 = sphi 0, %s102
      %s103 = sphi 0, %s100
      %s104 = sphi 0, %s103
      %s120 = sphi 0, %s104
      %s124 = sphi 0, %s124
      %s126 = sphi 0, %s124
      %s127 = sphi 0, %s126
      %s141 = sphi 0, %s127
      %s145 = sphi 0, %s145
      %s147 = sphi 0, %s145
      %s148 = sphi 0, %s147
      %s162 = sphi 0, %s148
      %s168 = sphi 0, %s170
      %s171 = sphi 0, %s168
      %s172 = sphi 0, %s171
      %s188 = sphi 0, %s172
    $region4: #{tpu_custom_call.1} parent=1 // loop_header_branch
      %25 = sbr.rel (%p23) target = $region8
    $region5: #{tpu_custom_call.1} parent=1 // loop_body
      %s27 = ssub.s32 %s22, 1
      %s28 = ssub.s32 %s22, 2
      %s29 = sadd.s32 %s22, 1
      %s31 = sadd.s32 %s30, 1
      %p34 = scmp.eq.s32.totalorder %s22, 1
      %p35 = scmp.ne.s32.totalorder %s30, %s32
      %p36 = scmp.eq.s32.totalorder %s22, 0
      %p37 = por %p35, %p36
      %p38 = scmp.ne.s32.totalorder %s30, %s32
      %p39 = scmp.eq.s32.totalorder %s27, 1
      %p40 = por %p38, %p39
      %p41 = scmp.ne.s32.totalorder %s32, %s33
      %p42 = scmp.eq.s32.totalorder %s27, 0
      %p43 = por %p41, %p42
      %p44 = scmp.ne.s32.totalorder %s32, %s33
      %p45 = scmp.eq.s32.totalorder %s28, 1
      %p46 = por %p44, %p45
      %p48 = scmp.ne.s32.totalorder %s33, %s47
      %p49 = scmp.eq.s32.totalorder %s28, 0
      %p50 = por %p48, %p49
      %s51 = ssub.s32 %s22, %s29
      %p52 = scmp.eq.s32.totalorder %s51, 0
      %s54 = sadd.s32 %s53, 1
      %s55 = scalar_select %p52, %s53, %s54
      %p58 = pneg %p52
      %p59 = scmp.eq.s32.totalorder %s22, 1
      %p60 = por %p58, %p59
      %p61 = scmp.ne.s32.totalorder %s53, %s56
      %p62 = scmp.eq.s32.totalorder %s22, 0
      %p63 = por %p61, %p62
      %p64 = scmp.ne.s32.totalorder %s53, %s56
      %p65 = scmp.eq.s32.totalorder %s27, 1
      %p66 = por %p64, %p65
      %p67 = scmp.ne.s32.totalorder %s56, %s57
      %p68 = scmp.eq.s32.totalorder %s27, 0
      %p69 = por %p67, %p68
      %p70 = scmp.ne.s32.totalorder %s56, %s57
      %p71 = scmp.eq.s32.totalorder %s28, 1
      %p72 = por %p70, %p71
      %p74 = scmp.ne.s32.totalorder %s57, %s73
      %p75 = scmp.eq.s32.totalorder %s28, 0
      %p76 = por %p74, %p75
      %s78 = sadd.s32 %s77, 1
      %p81 = scmp.eq.s32.totalorder %s22, 1
      %p82 = scmp.ne.s32.totalorder %s77, %s79
      %p83 = scmp.eq.s32.totalorder %s22, 0
      %p84 = por %p82, %p83
      %p85 = scmp.ne.s32.totalorder %s77, %s79
      %p86 = scmp.eq.s32.totalorder %s27, 1
      %p87 = por %p85, %p86
      %p88 = scmp.ne.s32.totalorder %s79, %s80
      %p89 = scmp.eq.s32.totalorder %s27, 0
      %p90 = por %p88, %p89
      %p91 = scmp.ne.s32.totalorder %s79, %s80
      %p92 = scmp.eq.s32.totalorder %s28, 1
      %p93 = por %p91, %p92
      %p95 = scmp.ne.s32.totalorder %s80, %s94
      %p96 = scmp.eq.s32.totalorder %s28, 0
      %p97 = por %p95, %p96
      %s98 = ssub.s32 %s22, %s29
      %p99 = scmp.eq.s32.totalorder %s98, 0
      %s101 = sadd.s32 %s100, 1
      %s102 = scalar_select %p99, %s100, %s101
      %p105 = pneg %p99
      %p106 = scmp.eq.s32.totalorder %s22, 1
      %p107 = por %p105, %p106
      %p108 = scmp.ne.s32.totalorder %s100, %s103
      %p109 = scmp.eq.s32.totalorder %s22, 0
      %p110 = por %p108, %p109
      %p111 = scmp.ne.s32.totalorder %s100, %s103
      %p112 = scmp.eq.s32.totalorder %s27, 1
      %p113 = por %p111, %p112
      %p114 = scmp.ne.s32.totalorder %s103, %s104
      %p115 = scmp.eq.s32.totalorder %s27, 0
      %p116 = por %p114, %p115
      %p117 = scmp.ne.s32.totalorder %s103, %s104
      %p118 = scmp.eq.s32.totalorder %s28, 1
      %p119 = por %p117, %p118
      %p121 = scmp.ne.s32.totalorder %s104, %s120
      %p122 = scmp.eq.s32.totalorder %s28, 0
      %p123 = por %p121, %p122
      %s125 = sadd.s32 %s124, 1
      %p128 = scmp.eq.s32.totalorder %s22, 1
      %p129 = scmp.ne.s32.totalorder %s124, %s126
      %p130 = scmp.eq.s32.totalorder %s22, 0
      %p131 = por %p129, %p130
      %p132 = scmp.ne.s32.totalorder %s124, %s126
      %p133 = scmp.eq.s32.totalorder %s27, 1
      %p134 = por %p132, %p133
      %p135 = scmp.ne.s32.totalorder %s126, %s127
      %p136 = scmp.eq.s32.totalorder %s27, 0
      %p137 = por %p135, %p136
      %p138 = scmp.ne.s32.totalorder %s126, %s127
      %p139 = scmp.eq.s32.totalorder %s28, 1
      %p140 = por %p138, %p139
      %p142 = scmp.ne.s32.totalorder %s127, %s141
      %p143 = scmp.eq.s32.totalorder %s28, 0
      %p144 = por %p142, %p143
      %s146 = sadd.s32 %s145, 1
      %p149 = scmp.eq.s32.totalorder %s22, 1
      %p150 = scmp.ne.s32.totalorder %s145, %s147
      %p151 = scmp.eq.s32.totalorder %s22, 0
      %p152 = por %p150, %p151
      %p153 = scmp.ne.s32.totalorder %s145, %s147
      %p154 = scmp.eq.s32.totalorder %s27, 1
      %p155 = por %p153, %p154
      %p156 = scmp.ne.s32.totalorder %s147, %s148
      %p157 = scmp.eq.s32.totalorder %s27, 0
      %p158 = por %p156, %p157
      %p159 = scmp.ne.s32.totalorder %s147, %s148
      %p160 = scmp.eq.s32.totalorder %s28, 1
      %p161 = por %p159, %p160
      %p163 = scmp.ne.s32.totalorder %s148, %s162
      %p164 = scmp.eq.s32.totalorder %s28, 0
      %p165 = por %p163, %p164
      %s166 = ssub.s32 %s22, %s29
      %p167 = scmp.eq.s32.totalorder %s166, 0
      %s169 = sadd.s32 %s168, 1
      %s170 = scalar_select %p167, %s168, %s169
      %p173 = pneg %p167
      %p174 = scmp.eq.s32.totalorder %s22, 1
      %p175 = por %p173, %p174
      %p176 = scmp.ne.s32.totalorder %s168, %s171
      %p177 = scmp.eq.s32.totalorder %s22, 0
      %p178 = por %p176, %p177
      %p179 = scmp.ne.s32.totalorder %s168, %s171
      %p180 = scmp.eq.s32.totalorder %s27, 1
      %p181 = por %p179, %p180
      %p182 = scmp.ne.s32.totalorder %s171, %s172
      %p183 = scmp.eq.s32.totalorder %s27, 0
      %p184 = por %p182, %p183
      %p185 = scmp.ne.s32.totalorder %s171, %s172
      %p186 = scmp.eq.s32.totalorder %s28, 1
      %p187 = por %p185, %p186
      %p189 = scmp.ne.s32.totalorder %s172, %s188
      %p190 = scmp.eq.s32.totalorder %s28, 0
      %p191 = por %p189, %p190
      %p192 = scmp.le.s32.totalorder 1, %s22
      %p193 = scmp.lt.s32.totalorder %s22, 3
      %p194 = pnand %p192, %p193
      %p195 = pneg %p194
      // Predicated region
      $region9: #{tpu_custom_call.1} parent=5 // pred_check
        _
      $region10: #{tpu_custom_call.1} parent=5 // pred_check_branch
        %197 = sbr.rel (%p194) target = $region12
      $region11: #{tpu_custom_call.1} parent=5 // pred_region
        %s198 = ssub.s32 %s22, 1
        // Predicated region
        $region13: #{tpu_custom_call.1} parent=11 // pred_check
          %p199 = pneg %p43
        $region14: #{tpu_custom_call.1} parent=11 // pred_check_branch
          %201 = sbr.rel (%p199) target = $region16
        $region15: #{tpu_custom_call.1} parent=11 // pred_region
          %s203 = ssub.s32 16, 16
          %204 = vsyncadd [#allocation7], %s203
          %207 = dma.hbm_to_smem %s0, 16, [#allocation4], [#allocation7]
        $region16: #{tpu_custom_call.1} parent=11 // pred_fallthru
          _
        // Predicated region
        $region17: #{tpu_custom_call.1} parent=11 // pred_check
          %p208 = pneg %p90
        $region18: #{tpu_custom_call.1} parent=11 // pred_check_branch
          %210 = sbr.rel (%p208) target = $region20
        $region19: #{tpu_custom_call.1} parent=11 // pred_region
          _
        $region20: #{tpu_custom_call.1} parent=11 // pred_fallthru
          _
        // Predicated region
        $region21: #{tpu_custom_call.1} parent=11 // pred_check
          %p211 = pneg %p137
        $region22: #{tpu_custom_call.1} parent=11 // pred_check_branch
          %213 = sbr.rel (%p211) target = $region24
        $region23: #{tpu_custom_call.1} parent=11 // pred_region
          _
        $region24: #{tpu_custom_call.1} parent=11 // pred_fallthru
          _
        // Predicated region
        $region25: #{tpu_custom_call.1} parent=11 // pred_check
          %p214 = pneg %p158
        $region26: #{tpu_custom_call.1} parent=11 // pred_check_branch
          %216 = sbr.rel (%p214) target = $region28
        $region27: #{tpu_custom_call.1} parent=11 // pred_region
          _
        $region28: #{tpu_custom_call.1} parent=11 // pred_fallthru
          _
      $region12: #{tpu_custom_call.1} parent=5 // pred_fallthru
        _
      %p217 = scmp.lt.s32.totalorder %s22, 2
      // Predicated region
      $region29: #{tpu_custom_call.1} parent=5 // pred_check
        %p218 = pneg %p217
      $region30: #{tpu_custom_call.1} parent=5 // pred_check_branch
        %220 = sbr.rel (%p218) target = $region32
      $region31: #{tpu_custom_call.1} parent=5 // pred_region
        // Predicated region
        $region33: #{tpu_custom_call.1} parent=31 // pred_check
          %p221 = pneg %p63
        $region34: #{tpu_custom_call.1} parent=31 // pred_check_branch
          %223 = sbr.rel (%p221) target = $region36
        $region35: #{tpu_custom_call.1} parent=31 // pred_region
          %s224 = sand.u32 %s53, 1
          %s225 = scalar_lea.sflag [#allocation5], %s224
          %s226 = sand.u32 %s53, 1
          %s227 = smul.addr %s226, 4
          %s228 = scalar_lea.vmem [#allocation8], %s227
          %s230 = ssub.s32 64, 64
          %231 = vsyncadd %s225, %s230
          %s232 = smul.addr %s22, 64
          %s233 = scalar_lea.hbm %s1, %s232
          %s235 = sshll.u32 %s228, 4
          %s236 = int_to_ptr.vmem [resolvable:$true] %s235
          %238 = dma.hbm_to_vmem [thread:$0]  %s233, 64, %s236, %s225
        $region36: #{tpu_custom_call.1} parent=31 // pred_fallthru
          _
        // Predicated region
        $region37: #{tpu_custom_call.1} parent=31 // pred_check
          %p239 = pneg %p110
        $region38: #{tpu_custom_call.1} parent=31 // pred_check_branch
          %241 = sbr.rel (%p239) target = $region40
        $region39: #{tpu_custom_call.1} parent=31 // pred_region
          %s242 = sand.u32 %s100, 1
          %s243 = scalar_lea.sflag [#allocation10], %s242
          %s244 = sand.u32 %s100, 1
          %s245 = smul.addr %s244, 16
          %s246 = scalar_lea.vmem [#allocation9], %s245
          %s248 = ssub.s32 256, 256
          %249 = vsyncadd %s243, %s248
          %s250 = smul.addr %s22, 2
          %s251 = smul.addr %s250, 128
          %s252 = scalar_lea.hbm %s3, %s251
          %s253 = sshll.u32 %s246, 4
          %s254 = int_to_ptr.vmem [resolvable:$true] %s253
          %259 = dma.hbm_to_vmem [thread:$0]  %s252, 256, %s254, %s243, 128, 128, 8
        $region40: #{tpu_custom_call.1} parent=31 // pred_fallthru
          _
      $region32: #{tpu_custom_call.1} parent=5 // pred_fallthru
        _
      %p260 = scmp.le.s32.totalorder 1, %s22
      %p261 = scmp.lt.s32.totalorder %s22, 3
      %p262 = pnand %p260, %p261
      %p263 = pneg %p262
      // Predicated region
      $region41: #{tpu_custom_call.1} parent=5 // pred_check
        _
      $region42: #{tpu_custom_call.1} parent=5 // pred_check_branch
        %265 = sbr.rel (%p262) target = $region44
      $region43: #{tpu_custom_call.1} parent=5 // pred_region
        %s266 = ssub.s32 %s22, 1
        // Predicated region
        $region45: #{tpu_custom_call.1} parent=43 // pred_check
          %p267 = pneg %p43
        $region46: #{tpu_custom_call.1} parent=43 // pred_check_branch
          %269 = sbr.rel (%p267) target = $region48
        $region47: #{tpu_custom_call.1} parent=43 // pred_region
          %270 = dma.done [#allocation7], 16
        $region48: #{tpu_custom_call.1} parent=43 // pred_fallthru
          _
        %s271 = sand.u32 %s56, 1
        %s272 = scalar_lea.sflag [#allocation5], %s271
        %s273 = sand.u32 %s56, 1
        %s274 = smul.addr %s273, 4
        %s275 = scalar_lea.vmem [#allocation8], %s274
        // Predicated region
        $region49: #{tpu_custom_call.1} parent=43 // pred_check
          %p276 = pneg %p69
        $region50: #{tpu_custom_call.1} parent=43 // pred_check_branch
          %278 = sbr.rel (%p276) target = $region52
        $region51: #{tpu_custom_call.1} parent=43 // pred_region
          %279 = dma.done %s272, 64
        $region52: #{tpu_custom_call.1} parent=43 // pred_fallthru
          _
        %s280 = sand.u32 %s103, 1
        %s281 = scalar_lea.sflag [#allocation10], %s280
        %s282 = sand.u32 %s103, 1
        %s283 = smul.addr %s282, 16
        %s284 = scalar_lea.vmem [#allocation9], %s283
        // Predicated region
        $region53: #{tpu_custom_call.1} parent=43 // pred_check
          %p285 = pneg %p116
        $region54: #{tpu_custom_call.1} parent=43 // pred_check_branch
          %287 = sbr.rel (%p285) target = $region56
        $region55: #{tpu_custom_call.1} parent=43 // pred_region
          %288 = dma.done %s281, 256
        $region56: #{tpu_custom_call.1} parent=43 // pred_fallthru
          _
        %289 = sfence
        %p290 = pneg %p43
        %p291 = pneg %p40
        %s292 = sand.u32 %s56, 1
        %s293 = scalar_lea.sflag [#allocation5], %s292
        %s294 = sand.u32 %s56, 1
        %s295 = smul.addr %s294, 4
        %s296 = scalar_lea.vmem [#allocation8], %s295
        %p297 = pneg %p69
        %p298 = pneg %p66
        %p299 = pneg %p90
        %p300 = pneg %p87
        %s301 = sand.u32 %s103, 1
        %s302 = scalar_lea.sflag [#allocation10], %s301
        %s303 = sand.u32 %s103, 1
        %s304 = smul.addr %s303, 16
        %s305 = scalar_lea.vmem [#allocation9], %s304
        %p306 = pneg %p116
        %p307 = pneg %p113
        %p308 = pneg %p137
        %p309 = pneg %p134
        %p310 = pneg %p158
        %p311 = pneg %p155
        %p312 = pneg %p184
        %p313 = pneg %p181
        %s314 = sand.u32 %s171, 1
        %s315 = scalar_lea.sflag [#allocation6], %s314
        %s316 = sand.u32 %s171, 1
        %s317 = smul.addr %s316, 8
        %s318 = scalar_lea.vmem [#allocation11], %s317
        %s319 = sld [smem:[#allocation4]]
        %s320 = sld [smem:[#allocation4 + $0x1]]
        %v321 = vld [vmem:[%s275] sm:$0xf]
        %v322 = vld [vmem:[%s2] sm:$0xff]
        %v323 = vld [vmem:[%s2 + $0x8] sm:$0xff]
        %v324 = vld [vmem:[%s284] sm:$0xff]
        %v325 = vld [vmem:[%s284 + $0x8] sm:$0xff]
        %v326 = vstv %s320
        %v327 = vmul.f32 %v326, %v324
        %v328 = vmul.f32 %v326, %v325
        %v329 = vadd.f32 %v322, %v327
        %v330 = vadd.f32 %v323, %v328
        %vm331 = vcmask 130048
        %332 = vst.msk [vmem:[#allocation2] sm:$0xff] %vm331, %v329
        %333 = vst.msk [vmem:[#allocation2 + $0x8] sm:$0xff] %vm331, %v330
        %v334 = vstv %s319
        %v335 = vmul.f32 %v334, %v321
        %vm336 = vcmask 125952
        %337 = vst.msk [vmem:[#allocation3] sm:$0xf] %vm336, %v321
        %v338 = vld [vmem:[#allocation2] sm:$0xff]
        %v339 = vld [vmem:[#allocation2 + $0x8] sm:$0xff]
        %v341 = vsel %vm331, %v321, 0
        %v344 = vsel %vm331, %v338, 0
        %v347 = vsel %vm331, %v339, 0
        %349 = vmatprep.subr.mxu0 0.0
        %350 = vmatpush1.xpose.msra.mxu0 %v344
        %351 = vmatprep.subr.mxu0 0.0
        %352 = vmatpush1.xpose.msra.mxu0 %v347
        %353 = vmatprep.subr.mxu0 0.0
        %354 = vmatpush1.xpose.msra.mxu0 0.0
        %355 = vmatprep.subr.mxu0 0.0
        %356 = vmatpush1.xpose.msra.mxu0 0.0
        %357 = vmatprep.subr.mxu0 0.0
        %358 = vmatpush1.xpose.msra.mxu0 0.0
        %359 = vmatprep.subr.mxu0 0.0
        %360 = vmatpush1.xpose.msra.mxu0 0.0
        %361 = vmatprep.subr.mxu0 0.0
        %362 = vmatpush1.xpose.msra.mxu0 0.0
        %363 = vmatprep.subr.mxu0 0.0
        %364 = vmatpush1.xpose.msra.mxu0 0.0
        %365 = vmatprep.subr.mxu0 0.0
        %366 = vmatpush1.xpose.msra.mxu0 0.0
        %367 = vmatprep.subr.mxu0 0.0
        %368 = vmatpush1.xpose.msra.mxu0 0.0
        %369 = vmatprep.subr.mxu0 0.0
        %370 = vmatpush1.xpose.msra.mxu0 0.0
        %371 = vmatprep.subr.mxu0 0.0
        %372 = vmatpush1.xpose.msra.mxu0 0.0
        %373 = vmatprep.subr.mxu0 0.0
        %374 = vmatpush1.xpose.msra.mxu0 0.0
        %375 = vmatprep.subr.mxu0 0.0
        %376 = vmatpush1.xpose.msra.mxu0 0.0
        %377 = vmatprep.subr.mxu0 0.0
        %378 = vmatpush1.xpose.msra.mxu0 0.0
        %379 = vmatprep.subr.mxu0 0.0
        %380 = vmatpush1.xpose.msra.mxu0 0.0
        %381 = vmatprep.subr.mxu0 0.0
        %382 = vmatpush1.xpose.msra.mxu0 0.0
        %383 = vmatprep.subr.mxu0 0.0
        %384 = vmatpush1.xpose.msra.mxu0 0.0
        %385 = vmatprep.subr.mxu0 0.0
        %386 = vmatpush1.xpose.msra.mxu0 0.0
        %387 = vmatprep.subr.mxu0 0.0
        %388 = vmatpush1.xpose.msra.mxu0 0.0
        %389 = vmatprep.subr.mxu0 0.0
        %390 = vmatpush1.xpose.msra.mxu0 0.0
        %391 = vmatprep.subr.mxu0 0.0
        %392 = vmatpush1.xpose.msra.mxu0 0.0
        %393 = vmatprep.subr.mxu0 0.0
        %394 = vmatpush1.xpose.msra.mxu0 0.0
        %395 = vmatprep.subr.mxu0 0.0
        %396 = vmatpush1.xpose.msra.mxu0 0.0
        %397 = vmatprep.subr.mxu0 0.0
        %398 = vmatpush1.xpose.msra.mxu0 0.0
        %399 = vmatprep.subr.mxu0 0.0
        %400 = vmatpush1.xpose.msra.mxu0 0.0
        %401 = vmatprep.subr.mxu0 0.0
        %402 = vmatpush1.xpose.msra.mxu0 0.0
        %403 = vmatprep.subr.mxu0 0.0
        %404 = vmatpush1.xpose.msra.mxu0 0.0
        %405 = vmatprep.subr.mxu0 0.0
        %406 = vmatpush1.xpose.msra.mxu0 0.0
        %407 = vmatprep.subr.mxu0 0.0
        %408 = vmatpush1.xpose.msra.mxu0 0.0
        %409 = vmatprep.subr.mxu0 0.0
        %410 = vmatpush1.xpose.msra.mxu0 0.0
        %411 = vmatprep.subr.mxu0 0.0
        %412 = vmatpush1.xpose.msra.mxu0 0.0
        %413 = vmatprep.mubr.f32.mxu0 0.0
        %414 = vmatmul.mubr.f32.gmra.mrb[0].mxu0 %v341
        %v415 = vpop.f32.mrb[0].mxu0
        %v416 = vadd.f32 0.0, %v415
        %v417 = vpop.f32.mrb[0].mxu0
        %418 = vdwg.mxu0
        %v419 = vadd.f32 %v335, %v416
        %420 = vst.msk [vmem:[#allocation3 + $0x4] sm:$0xf] %vm336, %v419
        %v421 = vld [vmem:[#allocation2] sm:$0xff]
        %v422 = vld [vmem:[#allocation2 + $0x8] sm:$0xff]
        %v424 = vsel %vm331, %v419, 0
        %v427 = vsel %vm331, %v421, 0
        %v430 = vsel %vm331, %v422, 0
        %432 = vmatprep.subr.mxu0 0.0
        %433 = vmatpush1.xpose.msra.mxu0 %v427
        %434 = vmatprep.subr.mxu0 0.0
        %435 = vmatpush1.xpose.msra.mxu0 %v430
        %436 = vmatprep.subr.mxu0 0.0
        %437 = vmatpush1.xpose.msra.mxu0 0.0
        %438 = vmatprep.subr.mxu0 0.0
        %439 = vmatpush1.xpose.msra.mxu0 0.0
        %440 = vmatprep.subr.mxu0 0.0
        %441 = vmatpush1.xpose.msra.mxu0 0.0
        %442 = vmatprep.subr.mxu0 0.0
        %443 = vmatpush1.xpose.msra.mxu0 0.0
        %444 = vmatprep.subr.mxu0 0.0
        %445 = vmatpush1.xpose.msra.mxu0 0.0
        %446 = vmatprep.subr.mxu0 0.0
        %447 = vmatpush1.xpose.msra.mxu0 0.0
        %448 = vmatprep.subr.mxu0 0.0
        %449 = vmatpush1.xpose.msra.mxu0 0.0
        %450 = vmatprep.subr.mxu0 0.0
        %451 = vmatpush1.xpose.msra.mxu0 0.0
        %452 = vmatprep.subr.mxu0 0.0
        %453 = vmatpush1.xpose.msra.mxu0 0.0
        %454 = vmatprep.subr.mxu0 0.0
        %455 = vmatpush1.xpose.msra.mxu0 0.0
        %456 = vmatprep.subr.mxu0 0.0
        %457 = vmatpush1.xpose.msra.mxu0 0.0
        %458 = vmatprep.subr.mxu0 0.0
        %459 = vmatpush1.xpose.msra.mxu0 0.0
        %460 = vmatprep.subr.mxu0 0.0
        %461 = vmatpush1.xpose.msra.mxu0 0.0
        %462 = vmatprep.subr.mxu0 0.0
        %463 = vmatpush1.xpose.msra.mxu0 0.0
        %464 = vmatprep.subr.mxu0 0.0
        %465 = vmatpush1.xpose.msra.mxu0 0.0
        %466 = vmatprep.subr.mxu0 0.0
        %467 = vmatpush1.xpose.msra.mxu0 0.0
        %468 = vmatprep.subr.mxu0 0.0
        %469 = vmatpush1.xpose.msra.mxu0 0.0
        %470 = vmatprep.subr.mxu0 0.0
        %471 = vmatpush1.xpose.msra.mxu0 0.0
        %472 = vmatprep.subr.mxu0 0.0
        %473 = vmatpush1.xpose.msra.mxu0 0.0
        %474 = vmatprep.subr.mxu0 0.0
        %475 = vmatpush1.xpose.msra.mxu0 0.0
        %476 = vmatprep.subr.mxu0 0.0
        %477 = vmatpush1.xpose.msra.mxu0 0.0
        %478 = vmatprep.subr.mxu0 0.0
        %479 = vmatpush1.xpose.msra.mxu0 0.0
        %480 = vmatprep.subr.mxu0 0.0
        %481 = vmatpush1.xpose.msra.mxu0 0.0
        %482 = vmatprep.subr.mxu0 0.0
        %483 = vmatpush1.xpose.msra.mxu0 0.0
        %484 = vmatprep.subr.mxu0 0.0
        %485 = vmatpush1.xpose.msra.mxu0 0.0
        %486 = vmatprep.subr.mxu0 0.0
        %487 = vmatpush1.xpose.msra.mxu0 0.0
        %488 = vmatprep.subr.mxu0 0.0
        %489 = vmatpush1.xpose.msra.mxu0 0.0
        %490 = vmatprep.subr.mxu0 0.0
        %491 = vmatpush1.xpose.msra.mxu0 0.0
        %492 = vmatprep.subr.mxu0 0.0
        %493 = vmatpush1.xpose.msra.mxu0 0.0
        %494 = vmatprep.subr.mxu0 0.0
        %495 = vmatpush1.xpose.msra.mxu0 0.0
        %496 = vmatprep.mubr.f32.mxu0 0.0
        %497 = vmatmul.mubr.f32.gmra.mrb[0].mxu0 %v424
        %v498 = vpop.f32.mrb[0].mxu0
        %v499 = vadd.f32 0.0, %v498
        %v500 = vpop.f32.mrb[0].mxu0
        %501 = vdwg.mxu0
        %v502 = vadd.f32 %v335, %v499
        %503 = vst.msk [vmem:[#allocation3 + $0x8] sm:$0xf] %vm336, %v502
        %v504 = vld [vmem:[%s4] sm:$0xff]
        %v505 = vld [vmem:[#allocation3] sm:$0xff]
        %v506 = vld [vmem:[#allocation3 + $0x8] sm:$0xf]
        %v507 = vld [vmem:[%s5] sm:$0xff]
        %509 = vset.pattern.permute.xlu0 0
        %510 = vperm.xlu0 %509, %v507
        %v511 = vpop.permute.xlu0 %510
        %vm513 = vcmask 97280
        %v515 = vsel %vm513, %v504, 0
        %vm517 = vcmask 1043456
        %v519 = vsel %vm517, %v506, 0
        %521 = vmatprep.subr.mxu0 0.0
        %522 = vmatpush1.msra.mxu0 %v505
        %523 = vmatprep.subr.mxu0 0.0
        %524 = vmatpush1.msra.mxu0 %v519
        %525 = vmatprep.subr.mxu0 0.0
        %526 = vmatpush1.msra.mxu0 0.0
        %527 = vmatprep.subr.mxu0 0.0
        %528 = vmatpush1.msra.mxu0 0.0
        %529 = vmatprep.subr.mxu0 0.0
        %530 = vmatpush1.msra.mxu0 0.0
        %531 = vmatprep.subr.mxu0 0.0
        %532 = vmatpush1.msra.mxu0 0.0
        %533 = vmatprep.subr.mxu0 0.0
        %534 = vmatpush1.msra.mxu0 0.0
        %535 = vmatprep.subr.mxu0 0.0
        %536 = vmatpush1.msra.mxu0 0.0
        %537 = vmatprep.subr.mxu0 0.0
        %538 = vmatpush1.msra.mxu0 0.0
        %539 = vmatprep.subr.mxu0 0.0
        %540 = vmatpush1.msra.mxu0 0.0
        %541 = vmatprep.subr.mxu0 0.0
        %542 = vmatpush1.msra.mxu0 0.0
        %543 = vmatprep.subr.mxu0 0.0
        %544 = vmatpush1.msra.mxu0 0.0
        %545 = vmatprep.subr.mxu0 0.0
        %546 = vmatpush1.msra.mxu0 0.0
        %547 = vmatprep.subr.mxu0 0.0
        %548 = vmatpush1.msra.mxu0 0.0
        %549 = vmatprep.subr.mxu0 0.0
        %550 = vmatpush1.msra.mxu0 0.0
        %551 = vmatprep.subr.mxu0 0.0
        %552 = vmatpush1.msra.mxu0 0.0
        %553 = vmatprep.subr.mxu0 0.0
        %554 = vmatpush1.msra.mxu0 0.0
        %555 = vmatprep.subr.mxu0 0.0
        %556 = vmatpush1.msra.mxu0 0.0
        %557 = vmatprep.subr.mxu0 0.0
        %558 = vmatpush1.msra.mxu0 0.0
        %559 = vmatprep.subr.mxu0 0.0
        %560 = vmatpush1.msra.mxu0 0.0
        %561 = vmatprep.subr.mxu0 0.0
        %562 = vmatpush1.msra.mxu0 0.0
        %563 = vmatprep.subr.mxu0 0.0
        %564 = vmatpush1.msra.mxu0 0.0
        %565 = vmatprep.subr.mxu0 0.0
        %566 = vmatpush1.msra.mxu0 0.0
        %567 = vmatprep.subr.mxu0 0.0
        %568 = vmatpush1.msra.mxu0 0.0
        %569 = vmatprep.subr.mxu0 0.0
        %570 = vmatpush1.msra.mxu0 0.0
        %571 = vmatprep.subr.mxu0 0.0
        %572 = vmatpush1.msra.mxu0 0.0
        %573 = vmatprep.subr.mxu0 0.0
        %574 = vmatpush1.msra.mxu0 0.0
        %575 = vmatprep.subr.mxu0 0.0
        %576 = vmatpush1.msra.mxu0 0.0
        %577 = vmatprep.subr.mxu0 0.0
        %578 = vmatpush1.msra.mxu0 0.0
        %579 = vmatprep.subr.mxu0 0.0
        %580 = vmatpush1.msra.mxu0 0.0
        %581 = vmatprep.subr.mxu0 0.0
        %582 = vmatpush1.msra.mxu0 0.0
        %583 = vmatprep.subr.mxu0 0.0
        %584 = vmatpush1.msra.mxu0 0.0
        %585 = vmatprep.mubr.f32.mxu0 0.0
        %586 = vmatmul.mubr.f32.gmra.mrb[0].mxu0 %v515
        %v587 = vpop.f32.mrb[0].mxu0
        %v588 = vadd.f32 %v511, %v587
        %v589 = vpop.f32.mrb[0].mxu0
        %590 = vdwg.mxu0
        %v591 = vmax.f32 %v588, 0.0
        %592 = vst.msk [vmem:[%s318] sm:$0xff] %vm331, %v591
        %s593 = sand.u32 %s171, 1
        %s594 = scalar_lea.sflag [#allocation6], %s593
        %s595 = sand.u32 %s171, 1
        %s596 = smul.addr %s595, 8
        %s597 = scalar_lea.vmem [#allocation11], %s596
        // Predicated region
        $region57: #{tpu_custom_call.1} parent=43 // pred_check
          %p598 = pneg %p181
        $region58: #{tpu_custom_call.1} parent=43 // pred_check_branch
          %600 = sbr.rel (%p598) target = $region60
        $region59: #{tpu_custom_call.1} parent=43 // pred_region
          %s602 = ssub.s32 128, 128
          %603 = vsyncadd %s594, %s602
          %s604 = smul.addr %s27, 128
          %s605 = scalar_lea.hbm %s6, %s604
          %s607 = sshll.u32 %s597, 4
          %s608 = int_to_ptr.vmem [resolvable:$true] %s607
          %610 = dma.vmem_to_hbm [thread:$0]  %s608, 128, %s605, %s594
        $region60: #{tpu_custom_call.1} parent=43 // pred_fallthru
          _
      $region44: #{tpu_custom_call.1} parent=5 // pred_fallthru
        _
      %p611 = scmp.le.s32.totalorder 2, %s22
      // Predicated region
      $region61: #{tpu_custom_call.1} parent=5 // pred_check
        %p612 = pneg %p611
      $region62: #{tpu_custom_call.1} parent=5 // pred_check_branch
        %614 = sbr.rel (%p612) target = $region64
      $region63: #{tpu_custom_call.1} parent=5 // pred_region
        %s615 = ssub.s32 %s22, 2
        // Predicated region
        $region65: #{tpu_custom_call.1} parent=63 // pred_check
          %p616 = pneg %p187
        $region66: #{tpu_custom_call.1} parent=63 // pred_check_branch
          %618 = sbr.rel (%p616) target = $region68
        $region67: #{tpu_custom_call.1} parent=63 // pred_region
          %s619 = sand.u32 %s172, 1
          %s620 = scalar_lea.sflag [#allocation6], %s619
          %s621 = sand.u32 %s172, 1
          %s622 = smul.addr %s621, 8
          %s623 = scalar_lea.vmem [#allocation11], %s622
          %624 = dma.done %s620, 128
        $region68: #{tpu_custom_call.1} parent=63 // pred_fallthru
          _
      $region64: #{tpu_custom_call.1} parent=5 // pred_fallthru
        _
    $region6: #{tpu_custom_call.1} parent=1 // loop_footer
      %s26 = sadd.s32 1, %s22
    $region7: #{tpu_custom_call.1} parent=1 // loop_footer_branch
      %21 = sbr.rel target = $region3
    $region8: #{tpu_custom_call.1} parent=1 // loop_exit
      _
    %625 = vsyncpa [#allocation5], 1
    %s626 = scalar_lea.sflag [#allocation5], 1
    %627 = vsyncpa %s626, 1
    %628 = vsyncpa [#allocation10], 1
    %s629 = scalar_lea.sflag [#allocation10], 1
    %630 = vsyncpa %s629, 1
    %631 = vsyncpa [#allocation6], 1
    %s632 = scalar_lea.sflag [#allocation6], 1
    %633 = vsyncpa %s632, 1
    %634 = vsyncpa [#allocation7], 1
    %s635 = scalar_lea.sflag [#allocation7], 1
    %636 = vsyncpa %s635, 1

</llo_original>
